<compile_context>
chip_gen: v7x
topology: tpu7x:2x2x1
jax: 0.10.0
libtpu: 0.0.40
codegen_flags: <defaults>
</compile_context>

<pallas_src>
import math
import functools

import jax
import jax.numpy as jnp
from jax.experimental import pallas as pl
from jax.experimental.pallas import tpu as pltpu


# -----------------------------------------------------------------------------
# Kernel
# -----------------------------------------------------------------------------
def _attention_kernel(enc_ref, dec_ref, wq_ref, bq_ref, wk_ref, bk_ref,
                      wv_ref, bv_ref, out_ref):
    bt, s_enc, hp = enc_ref.shape
    _, s_dec, _ = dec_ref.shape
    cdt = dec_ref.dtype              # MXU operand dtype (native / compute dtype)

    # ---- Projections --------------------------------------------------------
    # Flattening (bt, S, Hp) -> (bt*S, Hp) is a free relayout only when S is a
    # multiple of the 8-sublane tile; otherwise use batched einsum projections
    # (identical MXU work, no materialized reshape copy).
    if s_dec % 8 == 0 and s_enc % 8 == 0:
        dec2d = dec_ref[...].reshape(bt * s_dec, hp)
        enc2d = enc_ref[...].reshape(bt * s_enc, hp)
        # Note: 1/sqrt(H) is already folded into wq/bq at param-prep time.
        q = (jnp.dot(dec2d, wq_ref[...], preferred_element_type=jnp.float32)
             + bq_ref[...]).reshape(bt, s_dec, hp)
        k = (jnp.dot(enc2d, wk_ref[...], preferred_element_type=jnp.float32)
             + bk_ref[...]).reshape(bt, s_enc, hp)
        v = (jnp.dot(enc2d, wv_ref[...], preferred_element_type=jnp.float32)
             + bv_ref[...]).reshape(bt, s_enc, hp)
    else:
        q = jnp.einsum("bsd,dh->bsh", dec_ref[...], wq_ref[...],
                       preferred_element_type=jnp.float32) + bq_ref[...]
        k = jnp.einsum("bsd,dh->bsh", enc_ref[...], wk_ref[...],
                       preferred_element_type=jnp.float32) + bk_ref[...]
        v = jnp.einsum("bsd,dh->bsh", enc_ref[...], wv_ref[...],
                       preferred_element_type=jnp.float32) + bv_ref[...]

    # ---- Scaled scores (scale pre-folded; contraction on last dims, no .T) --
    scores = jnp.einsum("bqd,bkd->bqk", q.astype(cdt), k.astype(cdt),
                        preferred_element_type=jnp.float32)

    # ---- Softmax (f32, numerically stable, EUP reciprocal) ------------------
    m = jnp.max(scores, axis=-1, keepdims=True)
    p = jnp.exp(scores - m)
    inv = pl.reciprocal(jnp.sum(p, axis=-1, keepdims=True), approx=True)
    w = p * inv

    # ---- Context vectors -----------------------------------------------------
    ctx = jnp.einsum("bqk,bkd->bqd", w.astype(cdt), v.astype(cdt),
                     preferred_element_type=jnp.float32)
    out_ref[...] = ctx.astype(out_ref.dtype)


# -----------------------------------------------------------------------------
# Padding helpers
# -----------------------------------------------------------------------------
def _round_up(x, m):
    return ((x + m - 1) // m) * m


def _pad_last(x, target):
    pad = target - x.shape[-1]
    if pad == 0:
        return x
    return jnp.pad(x, [(0, 0)] * (x.ndim - 1) + [(0, pad)])


def _pad_square(w, target):
    p0, p1 = target - w.shape[0], target - w.shape[1]
    if p0 == 0 and p1 == 0:
        return w
    return jnp.pad(w, ((0, p0), (0, p1)))


# -----------------------------------------------------------------------------
# One-time parameter preprocessing (hoisted out of the hot path)
# -----------------------------------------------------------------------------
def prepare_params(params, hidden_dim, compute_dtype=None):
    """Pad weights lane-dense, fold 1/sqrt(H) into W_Q/b_Q, cast biases to f32.

    Call once; reuse the result for every forward call."""
    H = hidden_dim
    Hp = _round_up(H, 128)
    wdt = compute_dtype if compute_dtype is not None else params["wq"].dtype
    inv_scale = 1.0 / math.sqrt(H)
    return {
        "wq": _pad_square(params["wq"] * inv_scale, Hp).astype(wdt),
        "bq": _pad_last(params["bq"] * inv_scale, Hp).astype(jnp.float32),
        "wk": _pad_square(params["wk"], Hp).astype(wdt),
        "bk": _pad_last(params["bk"], Hp).astype(jnp.float32),
        "wv": _pad_square(params["wv"], Hp).astype(wdt),
        "bv": _pad_last(params["bv"], Hp).astype(jnp.float32),
    }


# -----------------------------------------------------------------------------
# Hardware-aware tile selection
# -----------------------------------------------------------------------------
def _tpu_vmem_capacity_bytes():
    try:
        return int(pltpu.get_tpu_info().vmem_capacity_bytes)
    except Exception:
        return 64 << 20          # conservative fallback (v7x per-TC VMEM)


def _num_tensorcores():
    try:
        kind = jax.devices()[0].device_kind.lower()
        if "v7" in kind:         # v7x: 2 TensorCores per chip
            return 2
    except Exception:
        pass
    return 1                     # v5e / v6e: single TensorCore


def _block_footprint_bytes(bt, s_enc, s_dec, hp, act_itemsize, w_itemsize):
    """Per-grid-step VMEM footprint with double-buffering of the I/O blocks,
    resident weights, f32 projection intermediates and score temporaries."""
    io = 2 * act_itemsize * bt * hp * (s_enc + 2 * s_dec)      # enc, dec, out (x2 bufs)
    weights = 3 * hp * hp * w_itemsize + 3 * hp * 4            # resident W's + f32 biases
    inter = 4 * bt * hp * (2 * s_enc + 2 * s_dec)              # f32 q, k, v, ctx
    scores = 2 * 4 * bt * s_dec * s_enc                        # >=2 live f32 score temps
    return io + weights + inter + scores


def _pick_batch_block(B, s_enc, s_dec, hp, act_itemsize, w_itemsize,
                      vmem_budget, num_tc):
    """Largest divisor of B whose footprint fits the budget.  On 2-TC chips,
    prefer a balanced grid that is a multiple of num_tc so megacore sharding
    keeps every core busy."""
    divisors = [d for d in range(1, B + 1) if B % d == 0]
    fitting = [d for d in divisors
               if _block_footprint_bytes(d, s_enc, s_dec, hp,
                                          act_itemsize, w_itemsize) <= vmem_budget]
    if not fitting:
        # TODO(synk): add sequence tiling (q-tile + flash KV axis) so very long
        #             sequences fit VMEM even at bt=1.
        return 1
    if num_tc > 1:
        balanced = [d for d in fitting if (B // d) % num_tc == 0]
        if balanced:
            return max(balanced)
    return max(fitting)


# -----------------------------------------------------------------------------
# Forward wrapper
# -----------------------------------------------------------------------------
def attention_forward(enc_output, dec_output, params, compute_dtype=None):
    """enc_output: (B, S_enc, H), dec_output: (B, S_dec, H) -> (B, S_dec, H).

    `params` must come from `prepare_params` (padded, scale-folded weights)."""
    B, S_enc, H = enc_output.shape
    _, S_dec, _ = dec_output.shape
    Hp = params["wq"].shape[0]
    out_dtype = dec_output.dtype

    if compute_dtype is not None:
        enc_output = enc_output.astype(compute_dtype)
        dec_output = dec_output.astype(compute_dtype)

    # Lane-dense activations (zero padding of the hidden dim is exact).
    enc = _pad_last(enc_output, Hp)
    dec = _pad_last(dec_output, Hp)

    act_itemsize = jnp.dtype(enc.dtype).itemsize
    w_itemsize = jnp.dtype(params["wq"].dtype).itemsize

    vmem_cap = _tpu_vmem_capacity_bytes()
    vmem_limit = int(0.75 * vmem_cap)          # ~96 MiB on v5e/v6e, ~48 MiB on v7x
    num_tc = _num_tensorcores()
    bt = _pick_batch_block(B, S_enc, S_dec, Hp, act_itemsize, w_itemsize,
                           int(0.8 * vmem_limit), num_tc)
    grid = (B // bt,)

    flops = (2 * B * S_dec * Hp * Hp            # Q projection
             + 4 * B * S_enc * Hp * Hp          # K and V projections
             + 4 * B * S_dec * S_enc * Hp)      # scores + context
    bytes_accessed = (act_itemsize * B * Hp * (S_enc + 2 * S_dec)   # enc + dec + out
                      + w_itemsize * 3 * Hp * Hp                    # weights
                      + 4 * 3 * Hp)                                 # f32 biases
    cost = pl.CostEstimate(flops=flops,
                           transcendentals=B * S_dec * S_enc,
                           bytes_accessed=bytes_accessed)

    out = pl.pallas_call(
        _attention_kernel,
        out_shape=jax.ShapeDtypeStruct((B, S_dec, Hp), out_dtype),
        grid_spec=pltpu.PrefetchScalarGridSpec(
            num_scalar_prefetch=0,
            grid=grid,
            in_specs=[
                pl.BlockSpec((bt, S_enc, Hp), lambda i: (i, 0, 0)),   # enc_output
                pl.BlockSpec((bt, S_dec, Hp), lambda i: (i, 0, 0)),   # dec_output
                pl.BlockSpec((Hp, Hp), lambda i: (0, 0)),             # W_Q^T (scaled)
                pl.BlockSpec((1, Hp), lambda i: (0, 0)),              # b_Q (scaled, f32)
                pl.BlockSpec((Hp, Hp), lambda i: (0, 0)),             # W_K^T
                pl.BlockSpec((1, Hp), lambda i: (0, 0)),              # b_K (f32)
                pl.BlockSpec((Hp, Hp), lambda i: (0, 0)),             # W_V^T
                pl.BlockSpec((1, Hp), lambda i: (0, 0)),              # b_V (f32)
            ],
            out_specs=pl.BlockSpec((bt, S_dec, Hp), lambda i: (i, 0, 0)),
        ),
        compiler_params=pltpu.CompilerParams(
            dimension_semantics=("parallel",),
            vmem_limit_bytes=vmem_limit,
        ),
        cost_estimate=cost,
    )(enc, dec, params["wq"], params["bq"], params["wk"], params["bk"],
      params["wv"], params["bv"])

    if Hp != H:
        out = out[..., :H]
    return out


# -----------------------------------------------------------------------------
# Synthetic init + pure-JAX reference
# -----------------------------------------------------------------------------
def init_params(key, hidden_dim, dtype=jnp.float32):
    """Deterministic synthetic init matching nn.Linear(hidden_dim, hidden_dim).

    Weights are stored already transposed to (in, out)."""
    keys = jax.random.split(key, 6)
    bound = 1.0 / math.sqrt(hidden_dim)  # PyTorch nn.Linear default bound

    def lin(kw, kb):
        w = jax.random.uniform(kw, (hidden_dim, hidden_dim), dtype,
                               minval=-bound, maxval=bound)
        b = jax.random.uniform(kb, (1, hidden_dim), dtype,
                               minval=-bound, maxval=bound)
        return w, b

    wq, bq = lin(keys[0], keys[1])
    wk, bk = lin(keys[2], keys[3])
    wv, bv = lin(keys[4], keys[5])
    return {"wq": wq, "bq": bq, "wk": wk, "bk": bk, "wv": wv, "bv": bv}


def reference_forward(enc_output, dec_output, params, hidden_dim):
    """Pure-JAX reference mirroring the PyTorch forward."""
    q = dec_output @ params["wq"] + params["bq"][0]
    k = enc_output @ params["wk"] + params["bk"][0]
    v = enc_output @ params["wv"] + params["bv"][0]
    scores = jnp.einsum("bqd,bkd->bqk", q, k) / math.sqrt(hidden_dim)
    w = jax.nn.softmax(scores, axis=-1)
    return jnp.einsum("bqk,bkd->bqd", w, v)


if __name__ == "__main__":
    B, S_enc, S_dec, H = 2, 8, 8, 32

    key = jax.random.PRNGKey(0)
    k_enc, k_dec, k_params = jax.random.split(key, 3)

    enc_output = jax.random.normal(k_enc, (B, S_enc, H), jnp.float32)
    dec_output = jax.random.normal(k_dec, (B, S_dec, H), jnp.float32)

    raw_params = init_params(k_params, H)
    # One-time preprocessing (padding / scale folding / bias cast) — hoisted
    # out of the per-call hot path.
    params = prepare_params(raw_params, H)

    fwd = jax.jit(attention_forward)
    out = jax.block_until_ready(fwd(enc_output, dec_output, params))

    ref = reference_forward(enc_output, dec_output, raw_params, H)
    assert out.shape == (B, S_dec, H)
    # approx-reciprocal softmax => slightly looser tolerance than exact divide
    assert jnp.allclose(out, ref, atol=2e-3, rtol=2e-3), "mismatch vs reference"

    print("KERNEL_OK")
</pallas_src>

<mosaic_0001>
module attributes {stable_mosaic.version = 11 : i64} {
  func.func @_attention_kernel(%arg0: i32, %arg1: memref<2x8x128xf32, #tpu.memory_space<vmem>>, %arg2: memref<2x8x128xf32, #tpu.memory_space<vmem>>, %arg3: memref<128x128xf32, #tpu.memory_space<vmem>>, %arg4: memref<1x128xf32, #tpu.memory_space<vmem>>, %arg5: memref<128x128xf32, #tpu.memory_space<vmem>>, %arg6: memref<1x128xf32, #tpu.memory_space<vmem>>, %arg7: memref<128x128xf32, #tpu.memory_space<vmem>>, %arg8: memref<1x128xf32, #tpu.memory_space<vmem>>, %arg9: memref<2x8x128xf32, #tpu.memory_space<vmem>>) attributes {dimension_semantics = [#tpu.dimension_semantics<parallel>], iteration_bounds = array<i64: 1>, scalar_prefetch = 0 : i64, scratch_operands = 0 : i64, tpu.core_type = #tpu.core_type<tc>, window_params = [{transform_indices = @transform_0, window_bounds = array<i64: 2, 8, 128>}, {transform_indices = @transform_1, window_bounds = array<i64: 2, 8, 128>}, {pipeline_mode = #tpu.pipeline_mode<synchronous>, transform_indices = @transform_2, window_bounds = array<i64: 128, 128>}, {pipeline_mode = #tpu.pipeline_mode<synchronous>, transform_indices = @transform_3, window_bounds = array<i64: 1, 128>}, {pipeline_mode = #tpu.pipeline_mode<synchronous>, transform_indices = @transform_4, window_bounds = array<i64: 128, 128>}, {pipeline_mode = #tpu.pipeline_mode<synchronous>, transform_indices = @transform_5, window_bounds = array<i64: 1, 128>}, {pipeline_mode = #tpu.pipeline_mode<synchronous>, transform_indices = @transform_6, window_bounds = array<i64: 128, 128>}, {pipeline_mode = #tpu.pipeline_mode<synchronous>, transform_indices = @transform_7, window_bounds = array<i64: 1, 128>}, {transform_indices = @transform_8, window_bounds = array<i64: 2, 8, 128>}]} {
    %c0 = arith.constant 0 : index
    %c0_0 = arith.constant 0 : index
    %c0_1 = arith.constant 0 : index
    %0 = vector.load %arg2[%c0, %c0_0, %c0_1] : memref<2x8x128xf32, #tpu.memory_space<vmem>>, vector<2x8x128xf32>
    %1 = vector.shape_cast %0 : vector<2x8x128xf32> to vector<16x128xf32>
    %c0_2 = arith.constant 0 : index
    %c0_3 = arith.constant 0 : index
    %c0_4 = arith.constant 0 : index
    %2 = vector.load %arg1[%c0_2, %c0_3, %c0_4] : memref<2x8x128xf32, #tpu.memory_space<vmem>>, vector<2x8x128xf32>
    %3 = vector.shape_cast %2 : vector<2x8x128xf32> to vector<16x128xf32>
    %c0_5 = arith.constant 0 : index
    %c0_6 = arith.constant 0 : index
    %4 = vector.load %arg3[%c0_5, %c0_6] : memref<128x128xf32, #tpu.memory_space<vmem>>, vector<128x128xf32>
    %cst = arith.constant dense<0.000000e+00> : vector<16x128xf32>
    %5 = tpu.matmul %1, %4, %cst {dimension_numbers = #tpu.dot_dimension_numbers<[1], [0], [0], [1], [0, 0, 1, 1], [], []>} : vector<16x128xf32>, vector<128x128xf32>, vector<16x128xf32> -> vector<16x128xf32>
    %c0_7 = arith.constant 0 : index
    %c0_8 = arith.constant 0 : index
    %6 = vector.load %arg4[%c0_7, %c0_8] : memref<1x128xf32, #tpu.memory_space<vmem>>, vector<1x128xf32>
    %7 = vector.broadcast %6 : vector<1x128xf32> to vector<16x128xf32>
    %8 = arith.addf %5, %7 : vector<16x128xf32>
    %9 = vector.shape_cast %8 : vector<16x128xf32> to vector<2x8x128xf32>
    %c0_9 = arith.constant 0 : index
    %c0_10 = arith.constant 0 : index
    %10 = vector.load %arg5[%c0_9, %c0_10] : memref<128x128xf32, #tpu.memory_space<vmem>>, vector<128x128xf32>
    %cst_11 = arith.constant dense<0.000000e+00> : vector<16x128xf32>
    %11 = tpu.matmul %3, %10, %cst_11 {dimension_numbers = #tpu.dot_dimension_numbers<[1], [0], [0], [1], [0, 0, 1, 1], [], []>} : vector<16x128xf32>, vector<128x128xf32>, vector<16x128xf32> -> vector<16x128xf32>
    %c0_12 = arith.constant 0 : index
    %c0_13 = arith.constant 0 : index
    %12 = vector.load %arg6[%c0_12, %c0_13] : memref<1x128xf32, #tpu.memory_space<vmem>>, vector<1x128xf32>
    %13 = vector.broadcast %12 : vector<1x128xf32> to vector<16x128xf32>
    %14 = arith.addf %11, %13 : vector<16x128xf32>
    %15 = vector.shape_cast %14 : vector<16x128xf32> to vector<2x8x128xf32>
    %c0_14 = arith.constant 0 : index
    %c0_15 = arith.constant 0 : index
    %16 = vector.load %arg7[%c0_14, %c0_15] : memref<128x128xf32, #tpu.memory_space<vmem>>, vector<128x128xf32>
    %cst_16 = arith.constant dense<0.000000e+00> : vector<16x128xf32>
    %17 = tpu.matmul %3, %16, %cst_16 {dimension_numbers = #tpu.dot_dimension_numbers<[1], [0], [0], [1], [0, 0, 1, 1], [], []>} : vector<16x128xf32>, vector<128x128xf32>, vector<16x128xf32> -> vector<16x128xf32>
    %c0_17 = arith.constant 0 : index
    %c0_18 = arith.constant 0 : index
    %18 = vector.load %arg8[%c0_17, %c0_18] : memref<1x128xf32, #tpu.memory_space<vmem>>, vector<1x128xf32>
    %19 = vector.broadcast %18 : vector<1x128xf32> to vector<16x128xf32>
    %20 = arith.addf %17, %19 : vector<16x128xf32>
    %21 = vector.shape_cast %20 : vector<16x128xf32> to vector<2x8x128xf32>
    "tpu.trace_start"() <{level = 10 : i32, message = "bqd,bkd->bqk"}> : () -> ()
    %cst_19 = arith.constant dense<0.000000e+00> : vector<2x8x8xf32>
    %22 = tpu.matmul %9, %15, %cst_19 {dimension_numbers = #tpu.dot_dimension_numbers<[2], [2], [1], [1], [0, 0, 0, 1, 1, 1], [0], [0]>} : vector<2x8x128xf32>, vector<2x8x128xf32>, vector<2x8x8xf32> -> vector<2x8x8xf32>
    "tpu.trace_stop"() : () -> ()
    %cst_20 = arith.constant dense<0xFF800000> : vector<2x8xf32>
    %23 = vector.multi_reduction <maximumf>, %22, %cst_20 [2] : vector<2x8x8xf32> to vector<2x8xf32>
    %24 = vector.shape_cast %23 : vector<2x8xf32> to vector<2x8x1xf32>
    %25 = vector.broadcast %24 : vector<2x8x1xf32> to vector<2x8x8xf32>
    %26 = arith.subf %22, %25 : vector<2x8x8xf32>
    %27 = math.exp %26 : vector<2x8x8xf32>
    %cst_21 = arith.constant dense<0.000000e+00> : vector<2x8xf32>
    %28 = vector.multi_reduction <add>, %27, %cst_21 [2] : vector<2x8x8xf32> to vector<2x8xf32>
    %29 = vector.shape_cast %28 : vector<2x8xf32> to vector<2x8x1xf32>
    %30 = tpu.reciprocal %29 {approx = true} : vector<2x8x1xf32> -> vector<2x8x1xf32>
    %31 = vector.broadcast %30 : vector<2x8x1xf32> to vector<2x8x8xf32>
    %32 = arith.mulf %27, %31 : vector<2x8x8xf32>
    "tpu.trace_start"() <{level = 10 : i32, message = "bqk,bkd->bqd"}> : () -> ()
    %cst_22 = arith.constant dense<0.000000e+00> : vector<2x8x128xf32>
    %33 = tpu.matmul %32, %21, %cst_22 {dimension_numbers = #tpu.dot_dimension_numbers<[2], [1], [1], [2], [0, 0, 0, 1, 1, 2], [0], [0]>} : vector<2x8x8xf32>, vector<2x8x128xf32>, vector<2x8x128xf32> -> vector<2x8x128xf32>
    "tpu.trace_stop"() : () -> ()
    %c0_23 = arith.constant 0 : index
    %c0_24 = arith.constant 0 : index
    %c0_25 = arith.constant 0 : index
    %34 = vector.load %arg9[%c0_23, %c0_24, %c0_25] : memref<2x8x128xf32, #tpu.memory_space<vmem>>, vector<2x8x128xf32>
    tpu.vector_store %arg9[%c0_23, %c0_24, %c0_25], %33 {strides = array<i32>} : memref<2x8x128xf32, #tpu.memory_space<vmem>>, vector<2x8x128xf32>,
    return
  }
  func.func @transform_0(%arg0: i32) -> (i32, i32, i32) {
    %c0_i32 = arith.constant 0 : i32
    %c0_i32_0 = arith.constant 0 : i32
    %c0_i32_1 = arith.constant 0 : i32
    return %arg0, %c0_i32, %c0_i32_0 : i32, i32, i32
  }
  func.func @transform_1(%arg0: i32) -> (i32, i32, i32) {
    %c0_i32 = arith.constant 0 : i32
    %c0_i32_0 = arith.constant 0 : i32
    %c0_i32_1 = arith.constant 0 : i32
    return %arg0, %c0_i32, %c0_i32_0 : i32, i32, i32
  }
  func.func @transform_2(%arg0: i32) -> (i32, i32) {
    %c0_i32 = arith.constant 0 : i32
    %c0_i32_0 = arith.constant 0 : i32
    %c0_i32_1 = arith.constant 0 : i32
    return %c0_i32, %c0_i32_0 : i32, i32
  }
  func.func @transform_3(%arg0: i32) -> (i32, i32) {
    %c0_i32 = arith.constant 0 : i32
    %c0_i32_0 = arith.constant 0 : i32
    %c0_i32_1 = arith.constant 0 : i32
    return %c0_i32, %c0_i32_0 : i32, i32
  }
  func.func @transform_4(%arg0: i32) -> (i32, i32) {
    %c0_i32 = arith.constant 0 : i32
    %c0_i32_0 = arith.constant 0 : i32
    %c0_i32_1 = arith.constant 0 : i32
    return %c0_i32, %c0_i32_0 : i32, i32
  }
  func.func @transform_5(%arg0: i32) -> (i32, i32) {
    %c0_i32 = arith.constant 0 : i32
    %c0_i32_0 = arith.constant 0 : i32
    %c0_i32_1 = arith.constant 0 : i32
    return %c0_i32, %c0_i32_0 : i32, i32
  }
  func.func @transform_6(%arg0: i32) -> (i32, i32) {
    %c0_i32 = arith.constant 0 : i32
    %c0_i32_0 = arith.constant 0 : i32
    %c0_i32_1 = arith.constant 0 : i32
    return %c0_i32, %c0_i32_0 : i32, i32
  }
  func.func @transform_7(%arg0: i32) -> (i32, i32) {
    %c0_i32 = arith.constant 0 : i32
    %c0_i32_0 = arith.constant 0 : i32
    %c0_i32_1 = arith.constant 0 : i32
    return %c0_i32, %c0_i32_0 : i32, i32
  }
  func.func @transform_8(%arg0: i32) -> (i32, i32, i32) {
    %c0_i32 = arith.constant 0 : i32
    %c0_i32_0 = arith.constant 0 : i32
    %c0_i32_1 = arith.constant 0 : i32
    return %arg0, %c0_i32, %c0_i32_0 : i32, i32, i32
  }
}

</mosaic_0001>

<llo_original>
// kernel: attention_forward.1
$region0: #{attention_forward.1}
  #allocation0 [shape = 'u32[]', space=smem, size = 0x4, offset = 0x4, fixed_abs, tag = 'smem constant byte address 0x4 - core index']
  #allocation1 [shape = 'u32[144,128]{1,0:T(1,128)}', space=vmem, size = 0x12000, scoped, tag = 'internal scratch']
  %s0 = inlined_call_operand.vmem [shape: f32[2,8,128], index: 0, kind: input, shape index: {}]
  %s1 = inlined_call_operand.vmem [shape: f32[2,8,128], index: 1, kind: input, shape index: {}]
  %s2 = inlined_call_operand.hbm [shape: f32[128,128], index: 2, kind: input, shape index: {}]
  %s3 = inlined_call_operand.vmem [shape: f32[1,128], index: 3, kind: input, shape index: {}]
  %s4 = inlined_call_operand.hbm [shape: f32[128,128], index: 4, kind: input, shape index: {}]
  %s5 = inlined_call_operand.vmem [shape: f32[1,128], index: 5, kind: input, shape index: {}]
  %s6 = inlined_call_operand.hbm [shape: f32[128,128], index: 6, kind: input, shape index: {}]
  %s7 = inlined_call_operand.vmem [shape: f32[1,128], index: 7, kind: input, shape index: {}]
  %s8 = inlined_call_operand.hbm [shape: f32[2,8,128], index: 8, kind: output, shape index: {}]
  %s9 = sld [smem:[#allocation0]]
  $region54: #{attention_forward.1} parent=0
    _
  %s11 = ssub.s32 1, %s9
  %s12 = scalar_select 0, %s11, %s9
  $region1: #{attention_forward.1} parent=0
    #allocation2 [shape = 'u8[65536]{0}', space=vmem, size = 0x10000, scoped, tag = 'input window, operand 2, single buffered']
    #allocation3 [shape = 's32[1]{0}', space=sflag, size = 0x4, scoped, tag = 'scoped memory for attention_forward.1']
    #allocation4 [shape = 's32[1]{0}', space=sflag, size = 0x4, scoped, tag = 'scoped memory for attention_forward.1']
    #allocation5 [shape = 'u8[65536]{0}', space=vmem, size = 0x10000, scoped, tag = 'input window, operand 4, single buffered']
    #allocation6 [shape = 's32[1]{0}', space=sflag, size = 0x4, scoped, tag = 'scoped memory for attention_forward.1']
    #allocation7 [shape = 'u8[65536]{0}', space=vmem, size = 0x10000, scoped, tag = 'input window, operand 6, single buffered']
    #allocation8 [shape = 'u8[8192]{0}', space=vmem, size = 0x2000, scoped, tag = 'output window, operand 0, single buffered']
    %13 = vsyncpa [#allocation3], 0
    %14 = vsyncpa [#allocation6], 0
    %15 = vsyncpa [#allocation4], 0
    // Predicated region
    $region2: #{attention_forward.1} parent=1 // pred_check
      _
    $region3: #{attention_forward.1} parent=1 // pred_check_branch
      %17 = sbr.rel (0) target = $region5
    $region4: #{attention_forward.1} parent=1 // pred_region
      _
    $region5: #{attention_forward.1} parent=1 // pred_fallthru
      _
    // Predicated region
    $region6: #{attention_forward.1} parent=1 // pred_check
      _
    $region7: #{attention_forward.1} parent=1 // pred_check_branch
      %19 = sbr.rel (0) target = $region9
    $region8: #{attention_forward.1} parent=1 // pred_region
      _
    $region9: #{attention_forward.1} parent=1 // pred_fallthru
      _
    // Predicated region
    $region10: #{attention_forward.1} parent=1 // pred_check
      _
    $region11: #{attention_forward.1} parent=1 // pred_check_branch
      %21 = sbr.rel (0) target = $region13
    $region12: #{attention_forward.1} parent=1 // pred_region
      %s23 = ssub.s32 2048, 2048
      %24 = vsyncadd [#allocation3], %s23
      %s25 = sshll.u32 [#allocation2], 4
      %s26 = int_to_ptr.vmem [resolvable:$true] %s25
      %31 = dma.hbm_to_vmem [thread:$0]  %s2, 2048, %s26, [#allocation3], 128, 128, 8
    $region13: #{attention_forward.1} parent=1 // pred_fallthru
      _
    // Predicated region
    $region14: #{attention_forward.1} parent=1 // pred_check
      _
    $region15: #{attention_forward.1} parent=1 // pred_check_branch
      %33 = sbr.rel (0) target = $region17
    $region16: #{attention_forward.1} parent=1 // pred_region
      _
    $region17: #{attention_forward.1} parent=1 // pred_fallthru
      _
    // Predicated region
    $region18: #{attention_forward.1} parent=1 // pred_check
      _
    $region19: #{attention_forward.1} parent=1 // pred_check_branch
      %35 = sbr.rel (0) target = $region21
    $region20: #{attention_forward.1} parent=1 // pred_region
      %s37 = ssub.s32 2048, 2048
      %38 = vsyncadd [#allocation6], %s37
      %s39 = sshll.u32 [#allocation5], 4
      %s40 = int_to_ptr.vmem [resolvable:$true] %s39
      %45 = dma.hbm_to_vmem [thread:$0]  %s4, 2048, %s40, [#allocation6], 128, 128, 8
    $region21: #{attention_forward.1} parent=1 // pred_fallthru
      _
    // Predicated region
    $region22: #{attention_forward.1} parent=1 // pred_check
      _
    $region23: #{attention_forward.1} parent=1 // pred_check_branch
      %47 = sbr.rel (0) target = $region25
    $region24: #{attention_forward.1} parent=1 // pred_region
      _
    $region25: #{attention_forward.1} parent=1 // pred_fallthru
      _
    // Predicated region
    $region26: #{attention_forward.1} parent=1 // pred_check
      _
    $region27: #{attention_forward.1} parent=1 // pred_check_branch
      %49 = sbr.rel (0) target = $region29
    $region28: #{attention_forward.1} parent=1 // pred_region
      %s51 = ssub.s32 2048, 2048
      %52 = vsyncadd [#allocation6], %s51
      %s53 = sshll.u32 [#allocation7], 4
      %s54 = int_to_ptr.vmem [resolvable:$true] %s53
      %59 = dma.hbm_to_vmem [thread:$0]  %s6, 2048, %s54, [#allocation6], 128, 128, 8
    $region29: #{attention_forward.1} parent=1 // pred_fallthru
      _
    // Predicated region
    $region30: #{attention_forward.1} parent=1 // pred_check
      _
    $region31: #{attention_forward.1} parent=1 // pred_check_branch
      %61 = sbr.rel (0) target = $region33
    $region32: #{attention_forward.1} parent=1 // pred_region
      _
    $region33: #{attention_forward.1} parent=1 // pred_fallthru
      _
    // Predicated region
    $region34: #{attention_forward.1} parent=1 // pred_check
      _
    $region35: #{attention_forward.1} parent=1 // pred_check_branch
      %63 = sbr.rel (0) target = $region37
    $region36: #{attention_forward.1} parent=1 // pred_region
      %64 = dma.done [#allocation3], 2048
    $region37: #{attention_forward.1} parent=1 // pred_fallthru
      _
    // Predicated region
    $region38: #{attention_forward.1} parent=1 // pred_check
      _
    $region39: #{attention_forward.1} parent=1 // pred_check_branch
      %66 = sbr.rel (0) target = $region41
    $region40: #{attention_forward.1} parent=1 // pred_region
      %67 = dma.done [#allocation6], 2048
    $region41: #{attention_forward.1} parent=1 // pred_fallthru
      _
    // Predicated region
    $region42: #{attention_forward.1} parent=1 // pred_check
      _
    $region43: #{attention_forward.1} parent=1 // pred_check_branch
      %69 = sbr.rel (0) target = $region45
    $region44: #{attention_forward.1} parent=1 // pred_region
      %70 = dma.done [#allocation6], 2048
    $region45: #{attention_forward.1} parent=1 // pred_fallthru
      _
    %v71 = vld [vmem:[%s1] sm:$0xff]
    %v72 = vld [vmem:[%s1 + $0x8] sm:$0xff]
    %v73 = vld [vmem:[%s0] sm:$0xff]
    %v74 = vld [vmem:[%s0 + $0x8] sm:$0xff]
    %v75 = vld [vmem:[#allocation2] sm:$0xff]
    %v76 = vld [vmem:[#allocation2 + $0x8] sm:$0xff]
    %v77 = vld [vmem:[#allocation2 + $0x10] sm:$0xff]
    %v78 = vld [vmem:[#allocation2 + $0x18] sm:$0xff]
    %v79 = vld [vmem:[#allocation2 + $0x20] sm:$0xff]
    %v80 = vld [vmem:[#allocation2 + $0x28] sm:$0xff]
    %v81 = vld [vmem:[#allocation2 + $0x30] sm:$0xff]
    %v82 = vld [vmem:[#allocation2 + $0x38] sm:$0xff]
    %v83 = vld [vmem:[#allocation2 + $0x40] sm:$0xff]
    %v84 = vld [vmem:[#allocation2 + $0x48] sm:$0xff]
    %v85 = vld [vmem:[#allocation2 + $0x50] sm:$0xff]
    %v86 = vld [vmem:[#allocation2 + $0x58] sm:$0xff]
    %v87 = vld [vmem:[#allocation2 + $0x60] sm:$0xff]
    %v88 = vld [vmem:[#allocation2 + $0x68] sm:$0xff]
    %v89 = vld [vmem:[#allocation2 + $0x70] sm:$0xff]
    %v90 = vld [vmem:[#allocation2 + $0x78] sm:$0xff]
    %v91 = vld [vmem:[%s3] sm:$0x1]
    %v93 = vlaneseq
    %v94 = vshrl.u32 %v93, 7
    %v95 = vsub.s32 0, %v94
    %v96 = vrot.slane %v91, %v95
    %98 = vmatprep.subr.mxu0 0.0
    %99 = vmatpush1.msra.mxu0 %v75
    %100 = vmatprep.subr.mxu0 0.0
    %101 = vmatpush1.msra.mxu0 %v76
    %102 = vmatprep.subr.mxu0 0.0
    %103 = vmatpush1.msra.mxu0 %v77
    %104 = vmatprep.subr.mxu0 0.0
    %105 = vmatpush1.msra.mxu0 %v78
    %106 = vmatprep.subr.mxu0 0.0
    %107 = vmatpush1.msra.mxu0 %v79
    %108 = vmatprep.subr.mxu0 0.0
    %109 = vmatpush1.msra.mxu0 %v80
    %110 = vmatprep.subr.mxu0 0.0
    %111 = vmatpush1.msra.mxu0 %v81
    %112 = vmatprep.subr.mxu0 0.0
    %113 = vmatpush1.msra.mxu0 %v82
    %114 = vmatprep.subr.mxu0 0.0
    %115 = vmatpush1.msra.mxu0 %v83
    %116 = vmatprep.subr.mxu0 0.0
    %117 = vmatpush1.msra.mxu0 %v84
    %118 = vmatprep.subr.mxu0 0.0
    %119 = vmatpush1.msra.mxu0 %v85
    %120 = vmatprep.subr.mxu0 0.0
    %121 = vmatpush1.msra.mxu0 %v86
    %122 = vmatprep.subr.mxu0 0.0
    %123 = vmatpush1.msra.mxu0 %v87
    %124 = vmatprep.subr.mxu0 0.0
    %125 = vmatpush1.msra.mxu0 %v88
    %126 = vmatprep.subr.mxu0 0.0
    %127 = vmatpush1.msra.mxu0 %v89
    %128 = vmatprep.subr.mxu0 0.0
    %129 = vmatpush1.msra.mxu0 %v90
    %130 = vmatprep.subr.mxu0 0.0
    %131 = vmatpush1.msra.mxu0 0.0
    %132 = vmatprep.subr.mxu0 0.0
    %133 = vmatpush1.msra.mxu0 0.0
    %134 = vmatprep.subr.mxu0 0.0
    %135 = vmatpush1.msra.mxu0 0.0
    %136 = vmatprep.subr.mxu0 0.0
    %137 = vmatpush1.msra.mxu0 0.0
    %138 = vmatprep.subr.mxu0 0.0
    %139 = vmatpush1.msra.mxu0 0.0
    %140 = vmatprep.subr.mxu0 0.0
    %141 = vmatpush1.msra.mxu0 0.0
    %142 = vmatprep.subr.mxu0 0.0
    %143 = vmatpush1.msra.mxu0 0.0
    %144 = vmatprep.subr.mxu0 0.0
    %145 = vmatpush1.msra.mxu0 0.0
    %146 = vmatprep.subr.mxu0 0.0
    %147 = vmatpush1.msra.mxu0 0.0
    %148 = vmatprep.subr.mxu0 0.0
    %149 = vmatpush1.msra.mxu0 0.0
    %150 = vmatprep.subr.mxu0 0.0
    %151 = vmatpush1.msra.mxu0 0.0
    %152 = vmatprep.subr.mxu0 0.0
    %153 = vmatpush1.msra.mxu0 0.0
    %154 = vmatprep.subr.mxu0 0.0
    %155 = vmatpush1.msra.mxu0 0.0
    %156 = vmatprep.subr.mxu0 0.0
    %157 = vmatpush1.msra.mxu0 0.0
    %158 = vmatprep.subr.mxu0 0.0
    %159 = vmatpush1.msra.mxu0 0.0
    %160 = vmatprep.subr.mxu0 0.0
    %161 = vmatpush1.msra.mxu0 0.0
    %162 = vmatprep.mubr.f32.mxu0 0.0
    %163 = vmatmul.mubr.f32.gmra.mrb[0].mxu0 %v71
    %v164 = vpop.f32.mrb[0].mxu0
    %v165 = vadd.f32 %v96, %v164
    %v166 = vpop.f32.mrb[0].mxu0
    %167 = vmatprep.mubr.f32.mxu0 0.0
    %168 = vmatmul.mubr.f32.gmra.mrb[0].mxu0 %v72
    %v169 = vpop.f32.mrb[0].mxu0
    %v170 = vadd.f32 %v96, %v169
    %v171 = vpop.f32.mrb[0].mxu0
    %172 = vdwg.mxu0
    %v173 = vld [vmem:[#allocation5] sm:$0xff]
    %v174 = vld [vmem:[#allocation5 + $0x8] sm:$0xff]
    %v175 = vld [vmem:[#allocation5 + $0x10] sm:$0xff]
    %v176 = vld [vmem:[#allocation5 + $0x18] sm:$0xff]
    %v177 = vld [vmem:[#allocation5 + $0x20] sm:$0xff]
    %v178 = vld [vmem:[#allocation5 + $0x28] sm:$0xff]
    %v179 = vld [vmem:[#allocation5 + $0x30] sm:$0xff]
    %v180 = vld [vmem:[#allocation5 + $0x38] sm:$0xff]
    %v181 = vld [vmem:[#allocation5 + $0x40] sm:$0xff]
    %v182 = vld [vmem:[#allocation5 + $0x48] sm:$0xff]
    %v183 = vld [vmem:[#allocation5 + $0x50] sm:$0xff]
    %v184 = vld [vmem:[#allocation5 + $0x58] sm:$0xff]
    %v185 = vld [vmem:[#allocation5 + $0x60] sm:$0xff]
    %v186 = vld [vmem:[#allocation5 + $0x68] sm:$0xff]
    %v187 = vld [vmem:[#allocation5 + $0x70] sm:$0xff]
    %v188 = vld [vmem:[#allocation5 + $0x78] sm:$0xff]
    %v189 = vld [vmem:[%s5] sm:$0x1]
    %v191 = vlaneseq
    %v192 = vshrl.u32 %v191, 7
    %v193 = vsub.s32 0, %v192
    %v194 = vrot.slane %v189, %v193
    %196 = vmatprep.subr.mxu0 0.0
    %197 = vmatpush1.msra.mxu0 %v173
    %198 = vmatprep.subr.mxu0 0.0
    %199 = vmatpush1.msra.mxu0 %v174
    %200 = vmatprep.subr.mxu0 0.0
    %201 = vmatpush1.msra.mxu0 %v175
    %202 = vmatprep.subr.mxu0 0.0
    %203 = vmatpush1.msra.mxu0 %v176
    %204 = vmatprep.subr.mxu0 0.0
    %205 = vmatpush1.msra.mxu0 %v177
    %206 = vmatprep.subr.mxu0 0.0
    %207 = vmatpush1.msra.mxu0 %v178
    %208 = vmatprep.subr.mxu0 0.0
    %209 = vmatpush1.msra.mxu0 %v179
    %210 = vmatprep.subr.mxu0 0.0
    %211 = vmatpush1.msra.mxu0 %v180
    %212 = vmatprep.subr.mxu0 0.0
    %213 = vmatpush1.msra.mxu0 %v181
    %214 = vmatprep.subr.mxu0 0.0
    %215 = vmatpush1.msra.mxu0 %v182
    %216 = vmatprep.subr.mxu0 0.0
    %217 = vmatpush1.msra.mxu0 %v183
    %218 = vmatprep.subr.mxu0 0.0
    %219 = vmatpush1.msra.mxu0 %v184
    %220 = vmatprep.subr.mxu0 0.0
    %221 = vmatpush1.msra.mxu0 %v185
    %222 = vmatprep.subr.mxu0 0.0
    %223 = vmatpush1.msra.mxu0 %v186
    %224 = vmatprep.subr.mxu0 0.0
    %225 = vmatpush1.msra.mxu0 %v187
    %226 = vmatprep.subr.mxu0 0.0
    %227 = vmatpush1.msra.mxu0 %v188
    %228 = vmatprep.subr.mxu0 0.0
    %229 = vmatpush1.msra.mxu0 0.0
    %230 = vmatprep.subr.mxu0 0.0
    %231 = vmatpush1.msra.mxu0 0.0
    %232 = vmatprep.subr.mxu0 0.0
    %233 = vmatpush1.msra.mxu0 0.0
    %234 = vmatprep.subr.mxu0 0.0
    %235 = vmatpush1.msra.mxu0 0.0
    %236 = vmatprep.subr.mxu0 0.0
    %237 = vmatpush1.msra.mxu0 0.0
    %238 = vmatprep.subr.mxu0 0.0
    %239 = vmatpush1.msra.mxu0 0.0
    %240 = vmatprep.subr.mxu0 0.0
    %241 = vmatpush1.msra.mxu0 0.0
    %242 = vmatprep.subr.mxu0 0.0
    %243 = vmatpush1.msra.mxu0 0.0
    %244 = vmatprep.subr.mxu0 0.0
    %245 = vmatpush1.msra.mxu0 0.0
    %246 = vmatprep.subr.mxu0 0.0
    %247 = vmatpush1.msra.mxu0 0.0
    %248 = vmatprep.subr.mxu0 0.0
    %249 = vmatpush1.msra.mxu0 0.0
    %250 = vmatprep.subr.mxu0 0.0
    %251 = vmatpush1.msra.mxu0 0.0
    %252 = vmatprep.subr.mxu0 0.0
    %253 = vmatpush1.msra.mxu0 0.0
    %254 = vmatprep.subr.mxu0 0.0
    %255 = vmatpush1.msra.mxu0 0.0
    %256 = vmatprep.subr.mxu0 0.0
    %257 = vmatpush1.msra.mxu0 0.0
    %258 = vmatprep.subr.mxu0 0.0
    %259 = vmatpush1.msra.mxu0 0.0
    %260 = vmatprep.mubr.f32.mxu0 0.0
    %261 = vmatmul.mubr.f32.gmra.mrb[0].mxu0 %v73
    %v262 = vpop.f32.mrb[0].mxu0
    %v263 = vadd.f32 %v194, %v262
    %v264 = vpop.f32.mrb[0].mxu0
    %265 = vmatprep.mubr.f32.mxu0 0.0
    %266 = vmatmul.mubr.f32.gmra.mrb[0].mxu0 %v74
    %v267 = vpop.f32.mrb[0].mxu0
    %v268 = vadd.f32 %v194, %v267
    %v269 = vpop.f32.mrb[0].mxu0
    %270 = vdwg.mxu0
    %v271 = vld [vmem:[#allocation7] sm:$0xff]
    %v272 = vld [vmem:[#allocation7 + $0x8] sm:$0xff]
    %v273 = vld [vmem:[#allocation7 + $0x10] sm:$0xff]
    %v274 = vld [vmem:[#allocation7 + $0x18] sm:$0xff]
    %v275 = vld [vmem:[#allocation7 + $0x20] sm:$0xff]
    %v276 = vld [vmem:[#allocation7 + $0x28] sm:$0xff]
    %v277 = vld [vmem:[#allocation7 + $0x30] sm:$0xff]
    %v278 = vld [vmem:[#allocation7 + $0x38] sm:$0xff]
    %v279 = vld [vmem:[#allocation7 + $0x40] sm:$0xff]
    %v280 = vld [vmem:[#allocation7 + $0x48] sm:$0xff]
    %v281 = vld [vmem:[#allocation7 + $0x50] sm:$0xff]
    %v282 = vld [vmem:[#allocation7 + $0x58] sm:$0xff]
    %v283 = vld [vmem:[#allocation7 + $0x60] sm:$0xff]
    %v284 = vld [vmem:[#allocation7 + $0x68] sm:$0xff]
    %v285 = vld [vmem:[#allocation7 + $0x70] sm:$0xff]
    %v286 = vld [vmem:[#allocation7 + $0x78] sm:$0xff]
    %v287 = vld [vmem:[%s7] sm:$0x1]
    %v289 = vlaneseq
    %v290 = vshrl.u32 %v289, 7
    %v291 = vsub.s32 0, %v290
    %v292 = vrot.slane %v287, %v291
    %294 = vmatprep.subr.mxu0 0.0
    %295 = vmatpush1.msra.mxu0 %v271
    %296 = vmatprep.subr.mxu0 0.0
    %297 = vmatpush1.msra.mxu0 %v272
    %298 = vmatprep.subr.mxu0 0.0
    %299 = vmatpush1.msra.mxu0 %v273
    %300 = vmatprep.subr.mxu0 0.0
    %301 = vmatpush1.msra.mxu0 %v274
    %302 = vmatprep.subr.mxu0 0.0
    %303 = vmatpush1.msra.mxu0 %v275
    %304 = vmatprep.subr.mxu0 0.0
    %305 = vmatpush1.msra.mxu0 %v276
    %306 = vmatprep.subr.mxu0 0.0
    %307 = vmatpush1.msra.mxu0 %v277
    %308 = vmatprep.subr.mxu0 0.0
    %309 = vmatpush1.msra.mxu0 %v278
    %310 = vmatprep.subr.mxu0 0.0
    %311 = vmatpush1.msra.mxu0 %v279
    %312 = vmatprep.subr.mxu0 0.0
    %313 = vmatpush1.msra.mxu0 %v280
    %314 = vmatprep.subr.mxu0 0.0
    %315 = vmatpush1.msra.mxu0 %v281
    %316 = vmatprep.subr.mxu0 0.0
    %317 = vmatpush1.msra.mxu0 %v282
    %318 = vmatprep.subr.mxu0 0.0
    %319 = vmatpush1.msra.mxu0 %v283
    %320 = vmatprep.subr.mxu0 0.0
    %321 = vmatpush1.msra.mxu0 %v284
    %322 = vmatprep.subr.mxu0 0.0
    %323 = vmatpush1.msra.mxu0 %v285
    %324 = vmatprep.subr.mxu0 0.0
    %325 = vmatpush1.msra.mxu0 %v286
    %326 = vmatprep.subr.mxu0 0.0
    %327 = vmatpush1.msra.mxu0 0.0
    %328 = vmatprep.subr.mxu0 0.0
    %329 = vmatpush1.msra.mxu0 0.0
    %330 = vmatprep.subr.mxu0 0.0
    %331 = vmatpush1.msra.mxu0 0.0
    %332 = vmatprep.subr.mxu0 0.0
    %333 = vmatpush1.msra.mxu0 0.0
    %334 = vmatprep.subr.mxu0 0.0
    %335 = vmatpush1.msra.mxu0 0.0
    %336 = vmatprep.subr.mxu0 0.0
    %337 = vmatpush1.msra.mxu0 0.0
    %338 = vmatprep.subr.mxu0 0.0
    %339 = vmatpush1.msra.mxu0 0.0
    %340 = vmatprep.subr.mxu0 0.0
    %341 = vmatpush1.msra.mxu0 0.0
    %342 = vmatprep.subr.mxu0 0.0
    %343 = vmatpush1.msra.mxu0 0.0
    %344 = vmatprep.subr.mxu0 0.0
    %345 = vmatpush1.msra.mxu0 0.0
    %346 = vmatprep.subr.mxu0 0.0
    %347 = vmatpush1.msra.mxu0 0.0
    %348 = vmatprep.subr.mxu0 0.0
    %349 = vmatpush1.msra.mxu0 0.0
    %350 = vmatprep.subr.mxu0 0.0
    %351 = vmatpush1.msra.mxu0 0.0
    %352 = vmatprep.subr.mxu0 0.0
    %353 = vmatpush1.msra.mxu0 0.0
    %354 = vmatprep.subr.mxu0 0.0
    %355 = vmatpush1.msra.mxu0 0.0
    %356 = vmatprep.subr.mxu0 0.0
    %357 = vmatpush1.msra.mxu0 0.0
    %358 = vmatprep.mubr.f32.mxu0 0.0
    %359 = vmatmul.mubr.f32.gmra.mrb[0].mxu0 %v73
    %v360 = vpop.f32.mrb[0].mxu0
    %v361 = vadd.f32 %v292, %v360
    %v362 = vpop.f32.mrb[0].mxu0
    %363 = vmatprep.mubr.f32.mxu0 0.0
    %364 = vmatmul.mubr.f32.gmra.mrb[0].mxu0 %v74
    %v365 = vpop.f32.mrb[0].mxu0
    %v366 = vadd.f32 %v292, %v365
    %v367 = vpop.f32.mrb[0].mxu0
    %368 = vdwg.mxu0
    %369 = vmatprep.subr.mxu0 0.0
    %370 = vmatpush1.xpose.msra.mxu0 %v263
    %371 = vmatprep.subr.mxu0 0.0
    %372 = vmatpush1.xpose.msra.mxu0 0.0
    %373 = vmatprep.subr.mxu0 0.0
    %374 = vmatpush1.xpose.msra.mxu0 0.0
    %375 = vmatprep.subr.mxu0 0.0
    %376 = vmatpush1.xpose.msra.mxu0 0.0
    %377 = vmatprep.subr.mxu0 0.0
    %378 = vmatpush1.xpose.msra.mxu0 0.0
    %379 = vmatprep.subr.mxu0 0.0
    %380 = vmatpush1.xpose.msra.mxu0 0.0
    %381 = vmatprep.subr.mxu0 0.0
    %382 = vmatpush1.xpose.msra.mxu0 0.0
    %383 = vmatprep.subr.mxu0 0.0
    %384 = vmatpush1.xpose.msra.mxu0 0.0
    %385 = vmatprep.subr.mxu0 0.0
    %386 = vmatpush1.xpose.msra.mxu0 0.0
    %387 = vmatprep.subr.mxu0 0.0
    %388 = vmatpush1.xpose.msra.mxu0 0.0
    %389 = vmatprep.subr.mxu0 0.0
    %390 = vmatpush1.xpose.msra.mxu0 0.0
    %391 = vmatprep.subr.mxu0 0.0
    %392 = vmatpush1.xpose.msra.mxu0 0.0
    %393 = vmatprep.subr.mxu0 0.0
    %394 = vmatpush1.xpose.msra.mxu0 0.0
    %395 = vmatprep.subr.mxu0 0.0
    %396 = vmatpush1.xpose.msra.mxu0 0.0
    %397 = vmatprep.subr.mxu0 0.0
    %398 = vmatpush1.xpose.msra.mxu0 0.0
    %399 = vmatprep.subr.mxu0 0.0
    %400 = vmatpush1.xpose.msra.mxu0 0.0
    %401 = vmatprep.subr.mxu0 0.0
    %402 = vmatpush1.xpose.msra.mxu0 0.0
    %403 = vmatprep.subr.mxu0 0.0
    %404 = vmatpush1.xpose.msra.mxu0 0.0
    %405 = vmatprep.subr.mxu0 0.0
    %406 = vmatpush1.xpose.msra.mxu0 0.0
    %407 = vmatprep.subr.mxu0 0.0
    %408 = vmatpush1.xpose.msra.mxu0 0.0
    %409 = vmatprep.subr.mxu0 0.0
    %410 = vmatpush1.xpose.msra.mxu0 0.0
    %411 = vmatprep.subr.mxu0 0.0
    %412 = vmatpush1.xpose.msra.mxu0 0.0
    %413 = vmatprep.subr.mxu0 0.0
    %414 = vmatpush1.xpose.msra.mxu0 0.0
    %415 = vmatprep.subr.mxu0 0.0
    %416 = vmatpush1.xpose.msra.mxu0 0.0
    %417 = vmatprep.subr.mxu0 0.0
    %418 = vmatpush1.xpose.msra.mxu0 0.0
    %419 = vmatprep.subr.mxu0 0.0
    %420 = vmatpush1.xpose.msra.mxu0 0.0
    %421 = vmatprep.subr.mxu0 0.0
    %422 = vmatpush1.xpose.msra.mxu0 0.0
    %423 = vmatprep.subr.mxu0 0.0
    %424 = vmatpush1.xpose.msra.mxu0 0.0
    %425 = vmatprep.subr.mxu0 0.0
    %426 = vmatpush1.xpose.msra.mxu0 0.0
    %427 = vmatprep.subr.mxu0 0.0
    %428 = vmatpush1.xpose.msra.mxu0 0.0
    %429 = vmatprep.subr.mxu0 0.0
    %430 = vmatpush1.xpose.msra.mxu0 0.0
    %431 = vmatprep.subr.mxu0 0.0
    %432 = vmatpush1.xpose.msra.mxu0 0.0
    %433 = vmatprep.mubr.f32.mxu0 0.0
    %434 = vmatmul.mubr.f32.gmra.mrb[0].mxu0 %v165
    %v435 = vpop.f32.mrb[0].mxu0
    %v436 = vadd.f32 0.0, %v435
    %v437 = vpop.f32.mrb[0].mxu0
    %438 = vdwg.mxu0
    %439 = vmatprep.subr.mxu0 0.0
    %440 = vmatpush1.xpose.msra.mxu0 %v268
    %441 = vmatprep.subr.mxu0 0.0
    %442 = vmatpush1.xpose.msra.mxu0 0.0
    %443 = vmatprep.subr.mxu0 0.0
    %444 = vmatpush1.xpose.msra.mxu0 0.0
    %445 = vmatprep.subr.mxu0 0.0
    %446 = vmatpush1.xpose.msra.mxu0 0.0
    %447 = vmatprep.subr.mxu0 0.0
    %448 = vmatpush1.xpose.msra.mxu0 0.0
    %449 = vmatprep.subr.mxu0 0.0
    %450 = vmatpush1.xpose.msra.mxu0 0.0
    %451 = vmatprep.subr.mxu0 0.0
    %452 = vmatpush1.xpose.msra.mxu0 0.0
    %453 = vmatprep.subr.mxu0 0.0
    %454 = vmatpush1.xpose.msra.mxu0 0.0
    %455 = vmatprep.subr.mxu0 0.0
    %456 = vmatpush1.xpose.msra.mxu0 0.0
    %457 = vmatprep.subr.mxu0 0.0
    %458 = vmatpush1.xpose.msra.mxu0 0.0
    %459 = vmatprep.subr.mxu0 0.0
    %460 = vmatpush1.xpose.msra.mxu0 0.0
    %461 = vmatprep.subr.mxu0 0.0
    %462 = vmatpush1.xpose.msra.mxu0 0.0
    %463 = vmatprep.subr.mxu0 0.0
    %464 = vmatpush1.xpose.msra.mxu0 0.0
    %465 = vmatprep.subr.mxu0 0.0
    %466 = vmatpush1.xpose.msra.mxu0 0.0
    %467 = vmatprep.subr.mxu0 0.0
    %468 = vmatpush1.xpose.msra.mxu0 0.0
    %469 = vmatprep.subr.mxu0 0.0
    %470 = vmatpush1.xpose.msra.mxu0 0.0
    %471 = vmatprep.subr.mxu0 0.0
    %472 = vmatpush1.xpose.msra.mxu0 0.0
    %473 = vmatprep.subr.mxu0 0.0
    %474 = vmatpush1.xpose.msra.mxu0 0.0
    %475 = vmatprep.subr.mxu0 0.0
    %476 = vmatpush1.xpose.msra.mxu0 0.0
    %477 = vmatprep.subr.mxu0 0.0
    %478 = vmatpush1.xpose.msra.mxu0 0.0
    %479 = vmatprep.subr.mxu0 0.0
    %480 = vmatpush1.xpose.msra.mxu0 0.0
    %481 = vmatprep.subr.mxu0 0.0
    %482 = vmatpush1.xpose.msra.mxu0 0.0
    %483 = vmatprep.subr.mxu0 0.0
    %484 = vmatpush1.xpose.msra.mxu0 0.0
    %485 = vmatprep.subr.mxu0 0.0
    %486 = vmatpush1.xpose.msra.mxu0 0.0
    %487 = vmatprep.subr.mxu0 0.0
    %488 = vmatpush1.xpose.msra.mxu0 0.0
    %489 = vmatprep.subr.mxu0 0.0
    %490 = vmatpush1.xpose.msra.mxu0 0.0
    %491 = vmatprep.subr.mxu0 0.0
    %492 = vmatpush1.xpose.msra.mxu0 0.0
    %493 = vmatprep.subr.mxu0 0.0
    %494 = vmatpush1.xpose.msra.mxu0 0.0
    %495 = vmatprep.subr.mxu0 0.0
    %496 = vmatpush1.xpose.msra.mxu0 0.0
    %497 = vmatprep.subr.mxu0 0.0
    %498 = vmatpush1.xpose.msra.mxu0 0.0
    %499 = vmatprep.subr.mxu0 0.0
    %500 = vmatpush1.xpose.msra.mxu0 0.0
    %501 = vmatprep.subr.mxu0 0.0
    %502 = vmatpush1.xpose.msra.mxu0 0.0
    %503 = vmatprep.mubr.f32.mxu0 0.0
    %504 = vmatmul.mubr.f32.gmra.mrb[0].mxu0 %v170
    %v505 = vpop.f32.mrb[0].mxu0
    %v506 = vadd.f32 0.0, %v505
    %v507 = vpop.f32.mrb[0].mxu0
    %508 = vdwg.mxu0
    %vm509 = vcmask 64512
    %v510 = vsel %vm509, %v436, -inf
    %511 = vmax.xlane.f32.xlu0 %v510
    %v512 = vpop.xlane.xlu0 %511
    %v513 = vsel %vm509, %v506, -inf
    %514 = vmax.xlane.f32.xlu0 %v513
    %v515 = vpop.xlane.xlu0 %514
    %v516 = vsub.f32 %v436, %v512
    %v517 = vsub.f32 %v506, %v515
    %v518 = vmul.f32 %v516, 1.442695
    %v519 = vpow.pop %v518
    %v520 = vmul.f32 %v517, 1.442695
    %v521 = vpow.pop %v520
    %v522 = vsel %vm509, %v519, 0.0
    %523 = vadd.xlane.f32.xlu0 %v522
    %v524 = vpop.xlane.xlu0 %523
    %v525 = vsel %vm509, %v521, 0.0
    %526 = vadd.xlane.f32.xlu0 %v525
    %v527 = vpop.xlane.xlu0 %526
    %v528 = vrcp.pop %v524
    %v529 = vrcp.pop %v527
    %v530 = vmul.f32 %v519, %v528
    %v531 = vmul.f32 %v521, %v529
    %v533 = vsel %vm509, %v530, 0
    %535 = vmatprep.subr.mxu0 0.0
    %536 = vmatpush1.msra.mxu0 %v361
    %537 = vmatprep.subr.mxu0 0.0
    %538 = vmatpush1.msra.mxu0 0.0
    %539 = vmatprep.subr.mxu0 0.0
    %540 = vmatpush1.msra.mxu0 0.0
    %541 = vmatprep.subr.mxu0 0.0
    %542 = vmatpush1.msra.mxu0 0.0
    %543 = vmatprep.subr.mxu0 0.0
    %544 = vmatpush1.msra.mxu0 0.0
    %545 = vmatprep.subr.mxu0 0.0
    %546 = vmatpush1.msra.mxu0 0.0
    %547 = vmatprep.subr.mxu0 0.0
    %548 = vmatpush1.msra.mxu0 0.0
    %549 = vmatprep.subr.mxu0 0.0
    %550 = vmatpush1.msra.mxu0 0.0
    %551 = vmatprep.subr.mxu0 0.0
    %552 = vmatpush1.msra.mxu0 0.0
    %553 = vmatprep.subr.mxu0 0.0
    %554 = vmatpush1.msra.mxu0 0.0
    %555 = vmatprep.subr.mxu0 0.0
    %556 = vmatpush1.msra.mxu0 0.0
    %557 = vmatprep.subr.mxu0 0.0
    %558 = vmatpush1.msra.mxu0 0.0
    %559 = vmatprep.subr.mxu0 0.0
    %560 = vmatpush1.msra.mxu0 0.0
    %561 = vmatprep.subr.mxu0 0.0
    %562 = vmatpush1.msra.mxu0 0.0
    %563 = vmatprep.subr.mxu0 0.0
    %564 = vmatpush1.msra.mxu0 0.0
    %565 = vmatprep.subr.mxu0 0.0
    %566 = vmatpush1.msra.mxu0 0.0
    %567 = vmatprep.subr.mxu0 0.0
    %568 = vmatpush1.msra.mxu0 0.0
    %569 = vmatprep.subr.mxu0 0.0
    %570 = vmatpush1.msra.mxu0 0.0
    %571 = vmatprep.subr.mxu0 0.0
    %572 = vmatpush1.msra.mxu0 0.0
    %573 = vmatprep.subr.mxu0 0.0
    %574 = vmatpush1.msra.mxu0 0.0
    %575 = vmatprep.subr.mxu0 0.0
    %576 = vmatpush1.msra.mxu0 0.0
    %577 = vmatprep.subr.mxu0 0.0
    %578 = vmatpush1.msra.mxu0 0.0
    %579 = vmatprep.subr.mxu0 0.0
    %580 = vmatpush1.msra.mxu0 0.0
    %581 = vmatprep.subr.mxu0 0.0
    %582 = vmatpush1.msra.mxu0 0.0
    %583 = vmatprep.subr.mxu0 0.0
    %584 = vmatpush1.msra.mxu0 0.0
    %585 = vmatprep.subr.mxu0 0.0
    %586 = vmatpush1.msra.mxu0 0.0
    %587 = vmatprep.subr.mxu0 0.0
    %588 = vmatpush1.msra.mxu0 0.0
    %589 = vmatprep.subr.mxu0 0.0
    %590 = vmatpush1.msra.mxu0 0.0
    %591 = vmatprep.subr.mxu0 0.0
    %592 = vmatpush1.msra.mxu0 0.0
    %593 = vmatprep.subr.mxu0 0.0
    %594 = vmatpush1.msra.mxu0 0.0
    %595 = vmatprep.subr.mxu0 0.0
    %596 = vmatpush1.msra.mxu0 0.0
    %597 = vmatprep.subr.mxu0 0.0
    %598 = vmatpush1.msra.mxu0 0.0
    %599 = vmatprep.mubr.f32.mxu0 0.0
    %600 = vmatmul.mubr.f32.gmra.mrb[0].mxu0 %v533
    %v601 = vpop.f32.mrb[0].mxu0
    %v602 = vadd.f32 0.0, %v601
    %v603 = vpop.f32.mrb[0].mxu0
    %604 = vdwg.mxu0
    %v606 = vsel %vm509, %v531, 0
    %608 = vmatprep.subr.mxu0 0.0
    %609 = vmatpush1.msra.mxu0 %v366
    %610 = vmatprep.subr.mxu0 0.0
    %611 = vmatpush1.msra.mxu0 0.0
    %612 = vmatprep.subr.mxu0 0.0
    %613 = vmatpush1.msra.mxu0 0.0
    %614 = vmatprep.subr.mxu0 0.0
    %615 = vmatpush1.msra.mxu0 0.0
    %616 = vmatprep.subr.mxu0 0.0
    %617 = vmatpush1.msra.mxu0 0.0
    %618 = vmatprep.subr.mxu0 0.0
    %619 = vmatpush1.msra.mxu0 0.0
    %620 = vmatprep.subr.mxu0 0.0
    %621 = vmatpush1.msra.mxu0 0.0
    %622 = vmatprep.subr.mxu0 0.0
    %623 = vmatpush1.msra.mxu0 0.0
    %624 = vmatprep.subr.mxu0 0.0
    %625 = vmatpush1.msra.mxu0 0.0
    %626 = vmatprep.subr.mxu0 0.0
    %627 = vmatpush1.msra.mxu0 0.0
    %628 = vmatprep.subr.mxu0 0.0
    %629 = vmatpush1.msra.mxu0 0.0
    %630 = vmatprep.subr.mxu0 0.0
    %631 = vmatpush1.msra.mxu0 0.0
    %632 = vmatprep.subr.mxu0 0.0
    %633 = vmatpush1.msra.mxu0 0.0
    %634 = vmatprep.subr.mxu0 0.0
    %635 = vmatpush1.msra.mxu0 0.0
    %636 = vmatprep.subr.mxu0 0.0
    %637 = vmatpush1.msra.mxu0 0.0
    %638 = vmatprep.subr.mxu0 0.0
    %639 = vmatpush1.msra.mxu0 0.0
    %640 = vmatprep.subr.mxu0 0.0
    %641 = vmatpush1.msra.mxu0 0.0
    %642 = vmatprep.subr.mxu0 0.0
    %643 = vmatpush1.msra.mxu0 0.0
    %644 = vmatprep.subr.mxu0 0.0
    %645 = vmatpush1.msra.mxu0 0.0
    %646 = vmatprep.subr.mxu0 0.0
    %647 = vmatpush1.msra.mxu0 0.0
    %648 = vmatprep.subr.mxu0 0.0
    %649 = vmatpush1.msra.mxu0 0.0
    %650 = vmatprep.subr.mxu0 0.0
    %651 = vmatpush1.msra.mxu0 0.0
    %652 = vmatprep.subr.mxu0 0.0
    %653 = vmatpush1.msra.mxu0 0.0
    %654 = vmatprep.subr.mxu0 0.0
    %655 = vmatpush1.msra.mxu0 0.0
    %656 = vmatprep.subr.mxu0 0.0
    %657 = vmatpush1.msra.mxu0 0.0
    %658 = vmatprep.subr.mxu0 0.0
    %659 = vmatpush1.msra.mxu0 0.0
    %660 = vmatprep.subr.mxu0 0.0
    %661 = vmatpush1.msra.mxu0 0.0
    %662 = vmatprep.subr.mxu0 0.0
    %663 = vmatpush1.msra.mxu0 0.0
    %664 = vmatprep.subr.mxu0 0.0
    %665 = vmatpush1.msra.mxu0 0.0
    %666 = vmatprep.subr.mxu0 0.0
    %667 = vmatpush1.msra.mxu0 0.0
    %668 = vmatprep.subr.mxu0 0.0
    %669 = vmatpush1.msra.mxu0 0.0
    %670 = vmatprep.subr.mxu0 0.0
    %671 = vmatpush1.msra.mxu0 0.0
    %672 = vmatprep.mubr.f32.mxu0 0.0
    %673 = vmatmul.mubr.f32.gmra.mrb[0].mxu0 %v606
    %v674 = vpop.f32.mrb[0].mxu0
    %v675 = vadd.f32 0.0, %v674
    %v676 = vpop.f32.mrb[0].mxu0
    %677 = vdwg.mxu0
    %678 = vst [vmem:[#allocation8] sm:$0xff] %v602
    %679 = vst [vmem:[#allocation8 + $0x8] sm:$0xff] %v675
    // Predicated region
    $region46: #{attention_forward.1} parent=1 // pred_check
      _
    $region47: #{attention_forward.1} parent=1 // pred_check_branch
      %681 = sbr.rel (0) target = $region49
    $region48: #{attention_forward.1} parent=1 // pred_region
      %s683 = ssub.s32 256, 256
      %684 = vsyncadd [#allocation4], %s683
      %s685 = sshll.u32 [#allocation8], 4
      %s686 = int_to_ptr.vmem [resolvable:$true] %s685
      %691 = dma.vmem_to_hbm [thread:$0]  %s686, 256, %s8, [#allocation4], 128, 128, 8
    $region49: #{attention_forward.1} parent=1 // pred_fallthru
      _
    // Predicated region
    $region50: #{attention_forward.1} parent=1 // pred_check
      _
    $region51: #{attention_forward.1} parent=1 // pred_check_branch
      %693 = sbr.rel (0) target = $region53
    $region52: #{attention_forward.1} parent=1 // pred_region
      %694 = dma.done [#allocation4], 256
    $region53: #{attention_forward.1} parent=1 // pred_fallthru
      _
    %695 = vsyncpa [#allocation3], 1
    %696 = vsyncpa [#allocation6], 1
    %697 = vsyncpa [#allocation4], 1

</llo_original>
